<compile_context>
chip_gen: v7x
topology: tpu7x:2x2x1
jax: 0.10.0
libtpu: 0.0.40
codegen_flags: <defaults>
</compile_context>

<pallas_src>
import functools

import jax
import jax.numpy as jnp
from jax.experimental import pallas as pl
from jax.experimental.pallas import tpu as pltpu


def _round_up(n, m):
    return ((n + m - 1) // m) * m


def _mlp_d2_kernel(x_ref, w1_ref, b1_ref, w2_ref, b2_ref, out_ref, *, neg_slope):
    # fc1 on the MXU: bf16 operands (cast in-register, hidden under the x DMA),
    # f32 accumulation.
    xb = x_ref[...].astype(jnp.bfloat16)                        # [TB, A]
    w1b = w1_ref[...].astype(jnp.bfloat16)                      # [A, H]
    h = jnp.dot(xb, w1b, preferred_element_type=jnp.float32)    # [TB, H] f32
    h = h + b1_ref[...]                                         # [1, H] broadcast
    # LeakyReLU: for 0 <= slope <= 1, max(h, slope*h) == leaky_relu(h).
    if 0.0 <= neg_slope <= 1.0:
        h = jnp.maximum(h, neg_slope * h)
    else:
        h = jnp.where(h >= 0, h, neg_slope * h)
    # fc2 (H -> 1) in full f32: VPU multiply + lane reduction (XLU slot is idle
    # here). Produces a lane-major row of TB logits -> unmasked lane-dense store.
    o = jnp.sum(h * w2_ref[...], axis=-1) + b2_ref[0, 0]        # [TB] f32
    out_ref[...] = o.reshape(out_ref.shape).astype(out_ref.dtype)
    # NOTE: self.sigmoid exists on the module but forward() does not apply it.


def mlp_d2_forward(x, att, w1, b1, w2, b2, *, activate_index, block_b=2048):
    """MLP_D2.forward(x, att) -> fc2(leaky_relu(fc1(x))), shape [B, 1].

    x: [B, attSize] (f32 or bf16); att: unused (signature parity with module).
    w1: [attSize, H]; b1: [H]; w2: [H, 1]; b2: [1].
    """
    del att  # unused by MLP_D2.forward
    B, A = x.shape
    H = w1.shape[1]

    # Batch tile: multiple of 128 rows (sublane alignment for f32 x blocks and
    # lane alignment for the lane-dense output). No padding pass over x:
    # Pallas handles the ragged last tile with masked reads.
    TB = max(128, min(_round_up(int(block_b), 128), _round_up(B, 128)))
    G = pl.cdiv(B, TB)
    # TODO(synk): on v7x, for very large B prefer an even G >= 2 (pass a smaller
    # block_b) so the "parallel" axis actually splits across both TensorCores.

    b1_row = b1.reshape(1, H).astype(jnp.float32)
    w2_row = w2.reshape(1, H).astype(jnp.float32)   # w2 is [H, 1] -> [1, H] row
    b2_s = b2.reshape(1, 1).astype(jnp.float32)

    kernel = functools.partial(_mlp_d2_kernel, neg_slope=float(activate_index))

    cost = pl.CostEstimate(
        flops=2 * B * A * H + 2 * B * H,
        transcendentals=0,
        bytes_accessed=(x.size * x.dtype.itemsize     # x read (dominant term)
                        + (A * H + 2 * H + 1) * 4     # params
                        + B * 4),                     # logits writeback
    )

    out = pl.pallas_call(
        kernel,
        out_shape=jax.ShapeDtypeStruct((G, 1, TB), jnp.float32),
        grid_spec=pltpu.PrefetchScalarGridSpec(
            num_scalar_prefetch=0,
            grid=(G,),
            in_specs=[
                pl.BlockSpec((TB, A), lambda i: (i, 0)),   # x: tiled over batch
                pl.BlockSpec((A, H), lambda i: (0, 0)),    # w1: VMEM-resident
                pl.BlockSpec((1, H), lambda i: (0, 0)),    # b1: VMEM-resident
                pl.BlockSpec((1, H), lambda i: (0, 0)),    # w2 row: VMEM-resident
                pl.BlockSpec((1, 1), lambda i: (0, 0)),    # b2: VMEM-resident
            ],
            out_specs=pl.BlockSpec((1, 1, TB), lambda i: (i, 0, 0)),
        ),
        compiler_params=pltpu.CompilerParams(
            # batch tiles are independent -> shard grid across TensorCores (v7x)
            dimension_semantics=("parallel",),
            # tiny tiles (~2 MiB at TB=2048); ample headroom on v5e/v6e/v7x
            vmem_limit_bytes=32 * 1024 * 1024,
        ),
        cost_estimate=cost,
    )(x, w1, b1_row, w2_row, b2_s)

    # Lane-dense (G, 1, TB) -> [B, 1]; tail rows past B (if any) are dropped.
    return out.reshape(G * TB)[:B].reshape(B, 1)


if __name__ == "__main__":
    # Shapes implied by the module: attSize=32, netD_hid=64; small batch.
    opt = {"attSize": 32, "netD_hid": 64, "activate_index": 0.2}
    B = 200  # deliberately not a multiple of the tile -> exercises the ragged tail

    key = jax.random.PRNGKey(0)
    kx, ka, k1, k2, kb1, kb2 = jax.random.split(key, 6)
    x = jax.random.normal(kx, (B, opt["attSize"]), jnp.float32)
    att = jax.random.normal(ka, (B, opt["attSize"]), jnp.float32)  # unused by forward

    # weights_init: Linear.weight ~ N(0, 0.02) (stored [out, in], transposed to
    # [in, out] for the kernel); biases would be 0 — small random biases here so
    # the bias-add path is actually exercised.
    w1 = (0.02 * jax.random.normal(k1, (opt["netD_hid"], opt["attSize"]), jnp.float32)).T
    w2 = (0.02 * jax.random.normal(k2, (1, opt["netD_hid"]), jnp.float32)).T
    b1 = 0.1 * jax.random.normal(kb1, (opt["netD_hid"],), jnp.float32)
    b2 = 0.1 * jax.random.normal(kb2, (1,), jnp.float32)

    # block_b=128 at B=200 -> grid=(2,), second tile ragged (rows 128..199).
    out = mlp_d2_forward(x, att, w1, b1, w2, b2,
                         activate_index=opt["activate_index"], block_b=128)
    out = jax.block_until_ready(out)
    assert out.shape == (B, 1), out.shape

    # Pure f32 reference (fc1 uses bf16 MXU operands in-kernel; fc2 is full f32).
    h = x @ w1 + b1
    h = jnp.where(h >= 0, h, opt["activate_index"] * h)
    ref = h @ w2 + b2
    err = float(jnp.max(jnp.abs(out - ref)))
    assert jnp.allclose(out, ref, atol=2e-3, rtol=2e-3), err

    print("KERNEL_OK")
</pallas_src>

<mosaic_0001>
module attributes {stable_mosaic.version = 11 : i64} {
  func.func @_mlp_d2_kernel(%arg0: i32, %arg1: memref<128x32xf32, #tpu.memory_space<vmem>>, %arg2: memref<32x64xf32, #tpu.memory_space<vmem>>, %arg3: memref<1x64xf32, #tpu.memory_space<vmem>>, %arg4: memref<1x64xf32, #tpu.memory_space<vmem>>, %arg5: memref<1x1xf32, #tpu.memory_space<vmem>>, %arg6: memref<1x1x128xf32, #tpu.memory_space<vmem>>) attributes {dimension_semantics = [#tpu.dimension_semantics<parallel>], iteration_bounds = array<i64: 2>, scalar_prefetch = 0 : i64, scratch_operands = 0 : i64, tpu.core_type = #tpu.core_type<tc>, window_params = [{transform_indices = @transform_0, window_bounds = array<i64: 128, 32>}, {pipeline_mode = #tpu.pipeline_mode<synchronous>, transform_indices = @transform_1, window_bounds = array<i64: 32, 64>}, {pipeline_mode = #tpu.pipeline_mode<synchronous>, transform_indices = @transform_2, window_bounds = array<i64: 1, 64>}, {pipeline_mode = #tpu.pipeline_mode<synchronous>, transform_indices = @transform_3, window_bounds = array<i64: 1, 64>}, {pipeline_mode = #tpu.pipeline_mode<synchronous>, transform_indices = @transform_4, window_bounds = array<i64: 1, 1>}, {transform_indices = @transform_5, window_bounds = array<i64: 1, 1, 128>}]} {
    %c0 = arith.constant 0 : index
    %c0_0 = arith.constant 0 : index
    %0 = vector.load %arg1[%c0, %c0_0] : memref<128x32xf32, #tpu.memory_space<vmem>>, vector<128x32xf32>
    %1 = arith.truncf %0 : vector<128x32xf32> to vector<128x32xbf16>
    %c0_1 = arith.constant 0 : index
    %c0_2 = arith.constant 0 : index
    %2 = vector.load %arg2[%c0_1, %c0_2] : memref<32x64xf32, #tpu.memory_space<vmem>>, vector<32x64xf32>
    %3 = arith.truncf %2 : vector<32x64xf32> to vector<32x64xbf16>
    %cst = arith.constant dense<0.000000e+00> : vector<128x64xf32>
    %4 = tpu.matmul %1, %3, %cst {dimension_numbers = #tpu.dot_dimension_numbers<[1], [0], [0], [1], [0, 0, 1, 1], [], []>} : vector<128x32xbf16>, vector<32x64xbf16>, vector<128x64xf32> -> vector<128x64xf32>
    %c0_3 = arith.constant 0 : index
    %c0_4 = arith.constant 0 : index
    %5 = vector.load %arg3[%c0_3, %c0_4] : memref<1x64xf32, #tpu.memory_space<vmem>>, vector<1x64xf32>
    %6 = vector.broadcast %5 : vector<1x64xf32> to vector<128x64xf32>
    %7 = arith.addf %4, %6 : vector<128x64xf32>
    %cst_5 = arith.constant 2.000000e-01 : f32
    %8 = vector.broadcast %cst_5 : f32 to vector<128x64xf32>
    %9 = arith.mulf %8, %7 : vector<128x64xf32>
    %10 = arith.maximumf %7, %9 : vector<128x64xf32>
    %c0_6 = arith.constant 0 : index
    %c0_7 = arith.constant 0 : index
    %11 = vector.load %arg4[%c0_6, %c0_7] : memref<1x64xf32, #tpu.memory_space<vmem>>, vector<1x64xf32>
    %12 = vector.broadcast %11 : vector<1x64xf32> to vector<128x64xf32>
    %13 = arith.mulf %10, %12 : vector<128x64xf32>
    %cst_8 = arith.constant dense<0.000000e+00> : vector<128xf32>
    %14 = vector.multi_reduction <add>, %13, %cst_8 [1] : vector<128x64xf32> to vector<128xf32>
    %c0_9 = arith.constant 0 : index
    %c0_10 = arith.constant 0 : index
    %15 = vector.load %arg5[%c0_9, %c0_10] : memref<1x1xf32, #tpu.memory_space<vmem>>, vector<1x1xf32>
    %16 = vector.extract %15[0, 0] : f32 from vector<1x1xf32>
    %17 = vector.broadcast %16 : f32 to vector<128xf32>
    %18 = arith.addf %14, %17 : vector<128xf32>
    %19 = vector.shape_cast %18 : vector<128xf32> to vector<1x1x128xf32>
    %c0_11 = arith.constant 0 : index
    %c0_12 = arith.constant 0 : index
    %c0_13 = arith.constant 0 : index
    %20 = vector.load %arg6[%c0_11, %c0_12, %c0_13] : memref<1x1x128xf32, #tpu.memory_space<vmem>>, vector<1x1x128xf32>
    tpu.vector_store %arg6[%c0_11, %c0_12, %c0_13], %19 {strides = array<i32>} : memref<1x1x128xf32, #tpu.memory_space<vmem>>, vector<1x1x128xf32>,
    return
  }
  func.func @transform_0(%arg0: i32) -> (i32, i32) {
    %c0_i32 = arith.constant 0 : i32
    %c0_i32_0 = arith.constant 0 : i32
    return %arg0, %c0_i32 : i32, i32
  }
  func.func @transform_1(%arg0: i32) -> (i32, i32) {
    %c0_i32 = arith.constant 0 : i32
    %c0_i32_0 = arith.constant 0 : i32
    %c0_i32_1 = arith.constant 0 : i32
    return %c0_i32, %c0_i32_0 : i32, i32
  }
  func.func @transform_2(%arg0: i32) -> (i32, i32) {
    %c0_i32 = arith.constant 0 : i32
    %c0_i32_0 = arith.constant 0 : i32
    %c0_i32_1 = arith.constant 0 : i32
    return %c0_i32, %c0_i32_0 : i32, i32
  }
  func.func @transform_3(%arg0: i32) -> (i32, i32) {
    %c0_i32 = arith.constant 0 : i32
    %c0_i32_0 = arith.constant 0 : i32
    %c0_i32_1 = arith.constant 0 : i32
    return %c0_i32, %c0_i32_0 : i32, i32
  }
  func.func @transform_4(%arg0: i32) -> (i32, i32) {
    %c0_i32 = arith.constant 0 : i32
    %c0_i32_0 = arith.constant 0 : i32
    %c0_i32_1 = arith.constant 0 : i32
    return %c0_i32, %c0_i32_0 : i32, i32
  }
  func.func @transform_5(%arg0: i32) -> (i32, i32, i32) {
    %c0_i32 = arith.constant 0 : i32
    %c0_i32_0 = arith.constant 0 : i32
    %c0_i32_1 = arith.constant 0 : i32
    return %arg0, %c0_i32, %c0_i32_0 : i32, i32, i32
  }
}

</mosaic_0001>

<llo_original>
// kernel: tpu_custom_call.1
$region0: #{tpu_custom_call.1}
  #allocation0 [shape = 'u32[]', space=smem, size = 0x4, offset = 0x4, fixed_abs, tag = 'smem constant byte address 0x4 - core index']
  #allocation1 [shape = 'u32[144,128]{1,0:T(1,128)}', space=vmem, size = 0x12000, scoped, tag = 'internal scratch']
  #allocation2 [shape = 'f32[1,1]{1,0:T(1,128)S(1)}', space=vmem, size = 0x200, scoped, tag = 'scoped memory for tpu_custom_call.1']
  %s0 = inlined_call_operand.vmem [shape: f32[200,32], index: 0, kind: input, shape index: {}]
  %s1 = inlined_call_operand.vmem [shape: f32[32,64], index: 1, kind: input, shape index: {}]
  %s2 = inlined_call_operand.vmem [shape: f32[1,64], index: 2, kind: input, shape index: {}]
  %s3 = inlined_call_operand.vmem [shape: f32[1,64], index: 3, kind: input, shape index: {}]
  %s4 = inlined_call_operand.<no memory space> [shape: f32[1,1], index: 4, kind: input, shape index: {}]
  %s5 = inlined_call_operand.hbm [shape: f32[2,1,128], index: 5, kind: output, shape index: {}]
  %s6 = sld [smem:[#allocation0]]
  $region53: #{tpu_custom_call.1} parent=0
    _
  %s8 = ssub.s32 1, %s6
  %s9 = scalar_select 0, %s8, %s6
  %v10 = vstv %s4
  %11 = vst [vmem:[#allocation2] sm:$0x1] %v10
  $region1: #{tpu_custom_call.1} parent=0
    #allocation3 [shape = 'u8[1024]{0}', space=vmem, size = 0x400, scoped, tag = 'output window, operand 0']
    #allocation4 [shape = 's32[2]{0}', space=sflag, size = 0x8, scoped, tag = 'scoped memory for tpu_custom_call.1']
    %12 = vsyncpa [#allocation4], 0
    %s13 = scalar_lea.sflag [#allocation4], 1
    %14 = vsyncpa %s13, 0
    loop: start=0, step=1, limit=4
    $region2: #{tpu_custom_call.1} parent=1 // loop_pre_header
      _
    $region3: #{tpu_custom_call.1} parent=1 // loop_header
      %s16 = sphi 0, %s20
      %p17 = scmp.ge.s32.totalorder %s16, 4
      %s26 = sphi 0, %s28
      %s29 = sphi 0, %s26
      %s30 = sphi 0, %s29
      %s46 = sphi 0, %s30
      %s50 = sphi 0, %s50
      %s52 = sphi 0, %s50
      %s53 = sphi 0, %s52
      %s67 = sphi 0, %s53
      %s71 = sphi 0, %s71
      %s73 = sphi 0, %s71
      %s74 = sphi 0, %s73
      %s88 = sphi 0, %s74
      %s92 = sphi 0, %s92
      %s94 = sphi 0, %s92
      %s95 = sphi 0, %s94
      %s109 = sphi 0, %s95
      %s113 = sphi 0, %s113
      %s115 = sphi 0, %s113
      %s116 = sphi 0, %s115
      %s130 = sphi 0, %s116
      %s136 = sphi 0, %s138
      %s139 = sphi 0, %s136
      %s140 = sphi 0, %s139
      %s156 = sphi 0, %s140
    $region4: #{tpu_custom_call.1} parent=1 // loop_header_branch
      %19 = sbr.rel (%p17) target = $region8
    $region5: #{tpu_custom_call.1} parent=1 // loop_body
      %s21 = ssub.s32 %s16, 1
      %s22 = ssub.s32 %s16, 2
      %s23 = sadd.s32 %s16, 1
      %s24 = ssub.s32 %s16, %s23
      %p25 = scmp.eq.s32.totalorder %s24, 0
      %s27 = sadd.s32 %s26, 1
      %s28 = scalar_select %p25, %s26, %s27
      %p31 = pneg %p25
      %p32 = scmp.eq.s32.totalorder %s16, 1
      %p33 = por %p31, %p32
      %p34 = scmp.ne.s32.totalorder %s26, %s29
      %p35 = scmp.eq.s32.totalorder %s16, 0
      %p36 = por %p34, %p35
      %p37 = scmp.ne.s32.totalorder %s26, %s29
      %p38 = scmp.eq.s32.totalorder %s21, 1
      %p39 = por %p37, %p38
      %p40 = scmp.ne.s32.totalorder %s29, %s30
      %p41 = scmp.eq.s32.totalorder %s21, 0
      %p42 = por %p40, %p41
      %p43 = scmp.ne.s32.totalorder %s29, %s30
      %p44 = scmp.eq.s32.totalorder %s22, 1
      %p45 = por %p43, %p44
      %p47 = scmp.ne.s32.totalorder %s30, %s46
      %p48 = scmp.eq.s32.totalorder %s22, 0
      %p49 = por %p47, %p48
      %s51 = sadd.s32 %s50, 1
      %p54 = scmp.eq.s32.totalorder %s16, 1
      %p55 = scmp.ne.s32.totalorder %s50, %s52
      %p56 = scmp.eq.s32.totalorder %s16, 0
      %p57 = por %p55, %p56
      %p58 = scmp.ne.s32.totalorder %s50, %s52
      %p59 = scmp.eq.s32.totalorder %s21, 1
      %p60 = por %p58, %p59
      %p61 = scmp.ne.s32.totalorder %s52, %s53
      %p62 = scmp.eq.s32.totalorder %s21, 0
      %p63 = por %p61, %p62
      %p64 = scmp.ne.s32.totalorder %s52, %s53
      %p65 = scmp.eq.s32.totalorder %s22, 1
      %p66 = por %p64, %p65
      %p68 = scmp.ne.s32.totalorder %s53, %s67
      %p69 = scmp.eq.s32.totalorder %s22, 0
      %p70 = por %p68, %p69
      %s72 = sadd.s32 %s71, 1
      %p75 = scmp.eq.s32.totalorder %s16, 1
      %p76 = scmp.ne.s32.totalorder %s71, %s73
      %p77 = scmp.eq.s32.totalorder %s16, 0
      %p78 = por %p76, %p77
      %p79 = scmp.ne.s32.totalorder %s71, %s73
      %p80 = scmp.eq.s32.totalorder %s21, 1
      %p81 = por %p79, %p80
      %p82 = scmp.ne.s32.totalorder %s73, %s74
      %p83 = scmp.eq.s32.totalorder %s21, 0
      %p84 = por %p82, %p83
      %p85 = scmp.ne.s32.totalorder %s73, %s74
      %p86 = scmp.eq.s32.totalorder %s22, 1
      %p87 = por %p85, %p86
      %p89 = scmp.ne.s32.totalorder %s74, %s88
      %p90 = scmp.eq.s32.totalorder %s22, 0
      %p91 = por %p89, %p90
      %s93 = sadd.s32 %s92, 1
      %p96 = scmp.eq.s32.totalorder %s16, 1
      %p97 = scmp.ne.s32.totalorder %s92, %s94
      %p98 = scmp.eq.s32.totalorder %s16, 0
      %p99 = por %p97, %p98
      %p100 = scmp.ne.s32.totalorder %s92, %s94
      %p101 = scmp.eq.s32.totalorder %s21, 1
      %p102 = por %p100, %p101
      %p103 = scmp.ne.s32.totalorder %s94, %s95
      %p104 = scmp.eq.s32.totalorder %s21, 0
      %p105 = por %p103, %p104
      %p106 = scmp.ne.s32.totalorder %s94, %s95
      %p107 = scmp.eq.s32.totalorder %s22, 1
      %p108 = por %p106, %p107
      %p110 = scmp.ne.s32.totalorder %s95, %s109
      %p111 = scmp.eq.s32.totalorder %s22, 0
      %p112 = por %p110, %p111
      %s114 = sadd.s32 %s113, 1
      %p117 = scmp.eq.s32.totalorder %s16, 1
      %p118 = scmp.ne.s32.totalorder %s113, %s115
      %p119 = scmp.eq.s32.totalorder %s16, 0
      %p120 = por %p118, %p119
      %p121 = scmp.ne.s32.totalorder %s113, %s115
      %p122 = scmp.eq.s32.totalorder %s21, 1
      %p123 = por %p121, %p122
      %p124 = scmp.ne.s32.totalorder %s115, %s116
      %p125 = scmp.eq.s32.totalorder %s21, 0
      %p126 = por %p124, %p125
      %p127 = scmp.ne.s32.totalorder %s115, %s116
      %p128 = scmp.eq.s32.totalorder %s22, 1
      %p129 = por %p127, %p128
      %p131 = scmp.ne.s32.totalorder %s116, %s130
      %p132 = scmp.eq.s32.totalorder %s22, 0
      %p133 = por %p131, %p132
      %s134 = ssub.s32 %s16, %s23
      %p135 = scmp.eq.s32.totalorder %s134, 0
      %s137 = sadd.s32 %s136, 1
      %s138 = scalar_select %p135, %s136, %s137
      %p141 = pneg %p135
      %p142 = scmp.eq.s32.totalorder %s16, 1
      %p143 = por %p141, %p142
      %p144 = scmp.ne.s32.totalorder %s136, %s139
      %p145 = scmp.eq.s32.totalorder %s16, 0
      %p146 = por %p144, %p145
      %p147 = scmp.ne.s32.totalorder %s136, %s139
      %p148 = scmp.eq.s32.totalorder %s21, 1
      %p149 = por %p147, %p148
      %p150 = scmp.ne.s32.totalorder %s139, %s140
      %p151 = scmp.eq.s32.totalorder %s21, 0
      %p152 = por %p150, %p151
      %p153 = scmp.ne.s32.totalorder %s139, %s140
      %p154 = scmp.eq.s32.totalorder %s22, 1
      %p155 = por %p153, %p154
      %p157 = scmp.ne.s32.totalorder %s140, %s156
      %p158 = scmp.eq.s32.totalorder %s22, 0
      %p159 = por %p157, %p158
      %p160 = scmp.le.s32.totalorder 1, %s16
      %p161 = scmp.lt.s32.totalorder %s16, 3
      %p162 = pnand %p160, %p161
      %p163 = pneg %p162
      // Predicated region
      $region9: #{tpu_custom_call.1} parent=5 // pred_check
        _
      $region10: #{tpu_custom_call.1} parent=5 // pred_check_branch
        %165 = sbr.rel (%p162) target = $region12
      $region11: #{tpu_custom_call.1} parent=5 // pred_region
        %s166 = ssub.s32 %s16, 1
        // Predicated region
        $region13: #{tpu_custom_call.1} parent=11 // pred_check
          %p167 = pneg %p63
        $region14: #{tpu_custom_call.1} parent=11 // pred_check_branch
          %169 = sbr.rel (%p167) target = $region16
        $region15: #{tpu_custom_call.1} parent=11 // pred_region
          _
        $region16: #{tpu_custom_call.1} parent=11 // pred_fallthru
          _
        // Predicated region
        $region17: #{tpu_custom_call.1} parent=11 // pred_check
          %p170 = pneg %p84
        $region18: #{tpu_custom_call.1} parent=11 // pred_check_branch
          %172 = sbr.rel (%p170) target = $region20
        $region19: #{tpu_custom_call.1} parent=11 // pred_region
          _
        $region20: #{tpu_custom_call.1} parent=11 // pred_fallthru
          _
        // Predicated region
        $region21: #{tpu_custom_call.1} parent=11 // pred_check
          %p173 = pneg %p105
        $region22: #{tpu_custom_call.1} parent=11 // pred_check_branch
          %175 = sbr.rel (%p173) target = $region24
        $region23: #{tpu_custom_call.1} parent=11 // pred_region
          _
        $region24: #{tpu_custom_call.1} parent=11 // pred_fallthru
          _
        // Predicated region
        $region25: #{tpu_custom_call.1} parent=11 // pred_check
          %p176 = pneg %p126
        $region26: #{tpu_custom_call.1} parent=11 // pred_check_branch
          %178 = sbr.rel (%p176) target = $region28
        $region27: #{tpu_custom_call.1} parent=11 // pred_region
          _
        $region28: #{tpu_custom_call.1} parent=11 // pred_fallthru
          _
      $region12: #{tpu_custom_call.1} parent=5 // pred_fallthru
        _
      %p179 = scmp.lt.s32.totalorder %s16, 2
      // Predicated region
      $region29: #{tpu_custom_call.1} parent=5 // pred_check
        %p180 = pneg %p179
      $region30: #{tpu_custom_call.1} parent=5 // pred_check_branch
        %182 = sbr.rel (%p180) target = $region32
      $region31: #{tpu_custom_call.1} parent=5 // pred_region
        // Predicated region
        $region33: #{tpu_custom_call.1} parent=31 // pred_check
          %p183 = pneg %p36
        $region34: #{tpu_custom_call.1} parent=31 // pred_check_branch
          %185 = sbr.rel (%p183) target = $region36
        $region35: #{tpu_custom_call.1} parent=31 // pred_region
          %s186 = smul.u32 16, %s16
          %s187 = ssub.s32 25, %s186
          %p188 = scmp.lt.s32.totalorder %s187, 16
          %s189 = scalar_select %p188, %s187, 16
          %s190 = smul.u32 128, %s189
          %p191 = scmp.lt.s32.totalorder %s186, 24
          %s192 = scalar_select %p191, %s186, 24
          %s193 = smul.addr %s192, 8
          %s194 = scalar_lea.vmem %s0, %s193
          %s195 = smul.u32 16, %s16
          %s196 = ssub.s32 25, %s195
          %p197 = scmp.lt.s32.totalorder %s196, 16
          %s198 = scalar_select %p197, %s196, 16
          %s199 = smul.u32 128, %s198
        $region36: #{tpu_custom_call.1} parent=31 // pred_fallthru
          _
      $region32: #{tpu_custom_call.1} parent=5 // pred_fallthru
        _
      %p200 = scmp.le.s32.totalorder 1, %s16
      %p201 = scmp.lt.s32.totalorder %s16, 3
      %p202 = pnand %p200, %p201
      %p203 = pneg %p202
      // Predicated region
      $region37: #{tpu_custom_call.1} parent=5 // pred_check
        _
      $region38: #{tpu_custom_call.1} parent=5 // pred_check_branch
        %205 = sbr.rel (%p202) target = $region40
      $region39: #{tpu_custom_call.1} parent=5 // pred_region
        %s206 = ssub.s32 %s16, 1
        %s207 = smul.u32 16, %s21
        %s208 = ssub.s32 25, %s207
        %p209 = scmp.lt.s32.totalorder %s208, 16
        %s210 = scalar_select %p209, %s208, 16
        %s211 = smul.u32 128, %s210
        %p212 = scmp.lt.s32.totalorder %s207, 24
        %s213 = scalar_select %p212, %s207, 24
        %s214 = smul.addr %s213, 8
        %s215 = scalar_lea.vmem %s0, %s214
        %p216 = pneg %p42
        %p217 = pneg %p39
        %p218 = pneg %p63
        %p219 = pneg %p60
        %p220 = pneg %p84
        %p221 = pneg %p81
        %p222 = pneg %p105
        %p223 = pneg %p102
        %p224 = pneg %p126
        %p225 = pneg %p123
        %p226 = pneg %p152
        %p227 = pneg %p149
        %s228 = sand.u32 %s139, 1
        %s229 = scalar_lea.sflag [#allocation4], %s228
        %s230 = sand.u32 %s139, 1
        %s231 = scalar_lea.vmem [#allocation3], %s230
        %s232 = smul.u32 16, %s21
        %s233 = ssub.s32 25, %s232
        %p234 = scmp.lt.s32.totalorder %s233, 16
        %s235 = scalar_select %p234, %s233, 16
        %s236 = smul.u32 128, %s235
        %p237 = scmp.lt.s32.totalorder %s232, 24
        %s238 = scalar_select %p237, %s232, 24
        %s239 = smul.addr %s238, 8
        %s240 = scalar_lea.vmem %s0, %s239
        %s241 = smul.u32 16, %s21
        %s242 = ssub.s32 25, %s241
        %p243 = scmp.lt.s32.totalorder %s242, 16
        %s244 = scalar_select %p243, %s242, 16
        %s245 = smul.u32 128, %s244
        %v247 = vld [vmem:[%s240] sm:$0xff]
        %v248 = vld [vmem:[%s240 + $0x8] sm:$0xff]
        %v249 = vld [vmem:[%s240 + $0x10] sm:$0xff]
        %v250 = vld [vmem:[%s240 + $0x18] sm:$0xff]
        %v251 = vld [vmem:[%s240 + $0x20] sm:$0xff]
        %v252 = vld [vmem:[%s240 + $0x28] sm:$0xff]
        %v253 = vld [vmem:[%s240 + $0x30] sm:$0xff]
        %v254 = vld [vmem:[%s240 + $0x38] sm:$0xff]
        %v255 = vld [vmem:[%s240 + $0x40] sm:$0xff]
        %v256 = vld [vmem:[%s240 + $0x48] sm:$0xff]
        %v257 = vld [vmem:[%s240 + $0x50] sm:$0xff]
        %v258 = vld [vmem:[%s240 + $0x58] sm:$0xff]
        %v259 = vld [vmem:[%s240 + $0x60] sm:$0xff]
        %v260 = vld [vmem:[%s240 + $0x68] sm:$0xff]
        %v261 = vld [vmem:[%s240 + $0x70] sm:$0xff]
        %v262 = vld [vmem:[%s240 + $0x78] sm:$0xff]
        %v263 = vpack.c.bf16 %v248, %v247
        %v264 = vpack.c.bf16 %v250, %v249
        %v265 = vpack.c.bf16 %v252, %v251
        %v266 = vpack.c.bf16 %v254, %v253
        %v267 = vpack.c.bf16 %v256, %v255
        %v268 = vpack.c.bf16 %v258, %v257
        %v269 = vpack.c.bf16 %v260, %v259
        %v270 = vpack.c.bf16 %v262, %v261
        %v271 = vld [vmem:[%s1] sm:$0xff]
        %v272 = vld [vmem:[%s1 + $0x8] sm:$0xff]
        %v273 = vld [vmem:[%s1 + $0x10] sm:$0xff]
        %v274 = vld [vmem:[%s1 + $0x18] sm:$0xff]
        %v275 = vpack.c.bf16 %v272, %v271
        %v276 = vpack.c.bf16 %v274, %v273
        %v277 = vld [vmem:[%s2] sm:$0x1]
        %v279 = vlaneseq
        %v280 = vshrl.u32 %v279, 7
        %v281 = vsub.s32 0, %v280
        %v282 = vrot.slane %v277, %v281
        %vm284 = vcmask 261120
        %v286 = vsel %vm284, %v263, 0
        %v289 = vsel %vm284, %v264, 0
        %v292 = vsel %vm284, %v265, 0
        %v295 = vsel %vm284, %v266, 0
        %v298 = vsel %vm284, %v267, 0
        %v301 = vsel %vm284, %v268, 0
        %v304 = vsel %vm284, %v269, 0
        %v307 = vsel %vm284, %v270, 0
        %309 = vmatprep.subr.bf16.mxu0 0
        %310 = vmatpush1.bf16.msra.mxu0 %v275
        %311 = vmatprep.subr.bf16.mxu0 0
        %312 = vmatpush1.bf16.msra.mxu0 %v276
        %313 = vmatprep.subr.bf16.mxu0 0
        %314 = vmatpush1.bf16.msra.mxu0 0
        %315 = vmatprep.subr.bf16.mxu0 0
        %316 = vmatpush1.bf16.msra.mxu0 0
        %317 = vmatprep.subr.bf16.mxu0 0
        %318 = vmatpush1.bf16.msra.mxu0 0
        %319 = vmatprep.subr.bf16.mxu0 0
        %320 = vmatpush1.bf16.msra.mxu0 0
        %321 = vmatprep.subr.bf16.mxu0 0
        %322 = vmatpush1.bf16.msra.mxu0 0
        %323 = vmatprep.subr.bf16.mxu0 0
        %324 = vmatpush1.bf16.msra.mxu0 0
        %325 = vmatprep.subr.bf16.mxu0 0
        %326 = vmatpush1.bf16.msra.mxu0 0
        %327 = vmatprep.subr.bf16.mxu0 0
        %328 = vmatpush1.bf16.msra.mxu0 0
        %329 = vmatprep.subr.bf16.mxu0 0
        %330 = vmatpush1.bf16.msra.mxu0 0
        %331 = vmatprep.subr.bf16.mxu0 0
        %332 = vmatpush1.bf16.msra.mxu0 0
        %333 = vmatprep.subr.bf16.mxu0 0
        %334 = vmatpush1.bf16.msra.mxu0 0
        %335 = vmatprep.subr.bf16.mxu0 0
        %336 = vmatpush1.bf16.msra.mxu0 0
        %337 = vmatprep.subr.bf16.mxu0 0
        %338 = vmatpush1.bf16.msra.mxu0 0
        %339 = vmatprep.subr.bf16.mxu0 0
        %340 = vmatpush1.bf16.msra.mxu0 0
        %341 = vmatprep.mubr.bf16.mxu0 0
        %342 = vmatmul.mubr.bf16.gmra.mrb[0].mxu0 %v286
        %v343 = vpop.f32.mrb[0].mxu0
        %v344 = vadd.f32 %v282, %v343
        %v345 = vpop.f32.mrb[0].mxu0
        %v346 = vpop.f32.mrb[0].mxu0
        %v347 = vadd.f32 %v282, %v346
        %v348 = vpop.f32.mrb[0].mxu0
        %349 = vmatprep.mubr.bf16.mxu0 0
        %350 = vmatmul.mubr.bf16.gmra.mrb[0].mxu0 %v289
        %v351 = vpop.f32.mrb[0].mxu0
        %v352 = vadd.f32 %v282, %v351
        %v353 = vpop.f32.mrb[0].mxu0
        %v354 = vpop.f32.mrb[0].mxu0
        %v355 = vadd.f32 %v282, %v354
        %v356 = vpop.f32.mrb[0].mxu0
        %357 = vmatprep.mubr.bf16.mxu0 0
        %358 = vmatmul.mubr.bf16.gmra.mrb[0].mxu0 %v292
        %v359 = vpop.f32.mrb[0].mxu0
        %v360 = vadd.f32 %v282, %v359
        %v361 = vpop.f32.mrb[0].mxu0
        %v362 = vpop.f32.mrb[0].mxu0
        %v363 = vadd.f32 %v282, %v362
        %v364 = vpop.f32.mrb[0].mxu0
        %365 = vmatprep.mubr.bf16.mxu0 0
        %366 = vmatmul.mubr.bf16.gmra.mrb[0].mxu0 %v295
        %v367 = vpop.f32.mrb[0].mxu0
        %v368 = vadd.f32 %v282, %v367
        %v369 = vpop.f32.mrb[0].mxu0
        %v370 = vpop.f32.mrb[0].mxu0
        %v371 = vadd.f32 %v282, %v370
        %v372 = vpop.f32.mrb[0].mxu0
        %373 = vmatprep.mubr.bf16.mxu0 0
        %374 = vmatmul.mubr.bf16.gmra.mrb[0].mxu0 %v298
        %v375 = vpop.f32.mrb[0].mxu0
        %v376 = vadd.f32 %v282, %v375
        %v377 = vpop.f32.mrb[0].mxu0
        %v378 = vpop.f32.mrb[0].mxu0
        %v379 = vadd.f32 %v282, %v378
        %v380 = vpop.f32.mrb[0].mxu0
        %381 = vmatprep.mubr.bf16.mxu0 0
        %382 = vmatmul.mubr.bf16.gmra.mrb[0].mxu0 %v301
        %v383 = vpop.f32.mrb[0].mxu0
        %v384 = vadd.f32 %v282, %v383
        %v385 = vpop.f32.mrb[0].mxu0
        %v386 = vpop.f32.mrb[0].mxu0
        %v387 = vadd.f32 %v282, %v386
        %v388 = vpop.f32.mrb[0].mxu0
        %389 = vmatprep.mubr.bf16.mxu0 0
        %390 = vmatmul.mubr.bf16.gmra.mrb[0].mxu0 %v304
        %v391 = vpop.f32.mrb[0].mxu0
        %v392 = vadd.f32 %v282, %v391
        %v393 = vpop.f32.mrb[0].mxu0
        %v394 = vpop.f32.mrb[0].mxu0
        %v395 = vadd.f32 %v282, %v394
        %v396 = vpop.f32.mrb[0].mxu0
        %397 = vmatprep.mubr.bf16.mxu0 0
        %398 = vmatmul.mubr.bf16.gmra.mrb[0].mxu0 %v307
        %v399 = vpop.f32.mrb[0].mxu0
        %v400 = vadd.f32 %v282, %v399
        %v401 = vpop.f32.mrb[0].mxu0
        %v402 = vpop.f32.mrb[0].mxu0
        %v403 = vadd.f32 %v282, %v402
        %v404 = vpop.f32.mrb[0].mxu0
        %405 = vdwg.mxu0
        %v406 = vmul.f32 %v344, 0.2
        %v407 = vmul.f32 %v347, 0.2
        %v408 = vmul.f32 %v352, 0.2
        %v409 = vmul.f32 %v355, 0.2
        %v410 = vmul.f32 %v360, 0.2
        %v411 = vmul.f32 %v363, 0.2
        %v412 = vmul.f32 %v368, 0.2
        %v413 = vmul.f32 %v371, 0.2
        %v414 = vmul.f32 %v376, 0.2
        %v415 = vmul.f32 %v379, 0.2
        %v416 = vmul.f32 %v384, 0.2
        %v417 = vmul.f32 %v387, 0.2
        %v418 = vmul.f32 %v392, 0.2
        %v419 = vmul.f32 %v395, 0.2
        %v420 = vmul.f32 %v400, 0.2
        %v421 = vmul.f32 %v403, 0.2
        %v422 = vmax.f32 %v344, %v406
        %v423 = vmax.f32 %v347, %v407
        %v424 = vmax.f32 %v352, %v408
        %v425 = vmax.f32 %v355, %v409
        %v426 = vmax.f32 %v360, %v410
        %v427 = vmax.f32 %v363, %v411
        %v428 = vmax.f32 %v368, %v412
        %v429 = vmax.f32 %v371, %v413
        %v430 = vmax.f32 %v376, %v414
        %v431 = vmax.f32 %v379, %v415
        %v432 = vmax.f32 %v384, %v416
        %v433 = vmax.f32 %v387, %v417
        %v434 = vmax.f32 %v392, %v418
        %v435 = vmax.f32 %v395, %v419
        %v436 = vmax.f32 %v400, %v420
        %v437 = vmax.f32 %v403, %v421
        %v438 = vld [vmem:[%s3] sm:$0x1]
        %v440 = vlaneseq
        %v441 = vshrl.u32 %v440, 7
        %v442 = vsub.s32 0, %v441
        %v443 = vrot.slane %v438, %v442
        %v445 = vmul.f32 %v422, %v443
        %v446 = vmul.f32 %v423, %v443
        %v447 = vmul.f32 %v424, %v443
        %v448 = vmul.f32 %v425, %v443
        %v449 = vmul.f32 %v426, %v443
        %v450 = vmul.f32 %v427, %v443
        %v451 = vmul.f32 %v428, %v443
        %v452 = vmul.f32 %v429, %v443
        %v453 = vmul.f32 %v430, %v443
        %v454 = vmul.f32 %v431, %v443
        %v455 = vmul.f32 %v432, %v443
        %v456 = vmul.f32 %v433, %v443
        %v457 = vmul.f32 %v434, %v443
        %v458 = vmul.f32 %v435, %v443
        %v459 = vmul.f32 %v436, %v443
        %v460 = vmul.f32 %v437, %v443
        %vm461 = vcmask 523264
        %v462 = vsel %vm461, %v445, 0.0
        %463 = vadd.xlane.f32.xlu0 %v462
        %v464 = vpop.xlane.xlu0 %463
        %v465 = vsel %vm461, %v446, 0.0
        %466 = vadd.xlane.f32.xlu0 %v465
        %v467 = vpop.xlane.xlu0 %466
        %v468 = vsel %vm461, %v447, 0.0
        %469 = vadd.xlane.f32.xlu0 %v468
        %v470 = vpop.xlane.xlu0 %469
        %v471 = vsel %vm461, %v448, 0.0
        %472 = vadd.xlane.f32.xlu0 %v471
        %v473 = vpop.xlane.xlu0 %472
        %v474 = vsel %vm461, %v449, 0.0
        %475 = vadd.xlane.f32.xlu0 %v474
        %v476 = vpop.xlane.xlu0 %475
        %v477 = vsel %vm461, %v450, 0.0
        %478 = vadd.xlane.f32.xlu0 %v477
        %v479 = vpop.xlane.xlu0 %478
        %v480 = vsel %vm461, %v451, 0.0
        %481 = vadd.xlane.f32.xlu0 %v480
        %v482 = vpop.xlane.xlu0 %481
        %v483 = vsel %vm461, %v452, 0.0
        %484 = vadd.xlane.f32.xlu0 %v483
        %v485 = vpop.xlane.xlu0 %484
        %v486 = vsel %vm461, %v453, 0.0
        %487 = vadd.xlane.f32.xlu0 %v486
        %v488 = vpop.xlane.xlu0 %487
        %v489 = vsel %vm461, %v454, 0.0
        %490 = vadd.xlane.f32.xlu0 %v489
        %v491 = vpop.xlane.xlu0 %490
        %v492 = vsel %vm461, %v455, 0.0
        %493 = vadd.xlane.f32.xlu0 %v492
        %v494 = vpop.xlane.xlu0 %493
        %v495 = vsel %vm461, %v456, 0.0
        %496 = vadd.xlane.f32.xlu0 %v495
        %v497 = vpop.xlane.xlu0 %496
        %v498 = vsel %vm461, %v457, 0.0
        %499 = vadd.xlane.f32.xlu0 %v498
        %v500 = vpop.xlane.xlu0 %499
        %v501 = vsel %vm461, %v458, 0.0
        %502 = vadd.xlane.f32.xlu0 %v501
        %v503 = vpop.xlane.xlu0 %502
        %v504 = vsel %vm461, %v459, 0.0
        %505 = vadd.xlane.f32.xlu0 %v504
        %v506 = vpop.xlane.xlu0 %505
        %v507 = vsel %vm461, %v460, 0.0
        %508 = vadd.xlane.f32.xlu0 %v507
        %v509 = vpop.xlane.xlu0 %508
        %v510 = vld [vmem:[#allocation2] sm:$0x1]
        %s511 = vtos %v510
        %v512 = vstv %s511
        %v513 = vadd.f32 %v464, %v512
        %v514 = vadd.f32 %v467, %v512
        %v515 = vadd.f32 %v470, %v512
        %v516 = vadd.f32 %v473, %v512
        %v517 = vadd.f32 %v476, %v512
        %v518 = vadd.f32 %v479, %v512
        %v519 = vadd.f32 %v482, %v512
        %v520 = vadd.f32 %v485, %v512
        %v521 = vadd.f32 %v488, %v512
        %v522 = vadd.f32 %v491, %v512
        %v523 = vadd.f32 %v494, %v512
        %v524 = vadd.f32 %v497, %v512
        %v525 = vadd.f32 %v500, %v512
        %v526 = vadd.f32 %v503, %v512
        %v527 = vadd.f32 %v506, %v512
        %v528 = vadd.f32 %v509, %v512
        %v545 = vlaneseq
        %v546 = vand.u32 %v545, 127
        %v547 = vlaneseq
        %v548 = vshrl.u32 %v547, 7
        %v549 = vsub.s32 %v546, %v548
        %v550 = vrot.slane %v513, %v549
        %v551 = vadd.s32 %v546, 4294967288
        %v552 = vlaneseq
        %v553 = vshrl.u32 %v552, 7
        %v554 = vsub.s32 %v551, %v553
        %v555 = vrot.slane %v514, %v554
        %vm556 = vcmask 130112
        %v557 = vsel %vm556, %v555, %v550
        %v558 = vadd.s32 %v546, 4294967280
        %v559 = vlaneseq
        %v560 = vshrl.u32 %v559, 7
        %v561 = vsub.s32 %v558, %v560
        %v562 = vrot.slane %v515, %v561
        %vm563 = vcmask 195712
        %v564 = vsel %vm563, %v562, %v557
        %v565 = vadd.s32 %v546, 4294967272
        %v566 = vlaneseq
        %v567 = vshrl.u32 %v566, 7
        %v568 = vsub.s32 %v565, %v567
        %v569 = vrot.slane %v516, %v568
        %vm570 = vcmask 261312
        %v571 = vsel %vm570, %v569, %v564
        %v572 = vadd.s32 %v546, 4294967264
        %v573 = vlaneseq
        %v574 = vshrl.u32 %v573, 7
        %v575 = vsub.s32 %v572, %v574
        %v576 = vrot.slane %v517, %v575
        %vm577 = vcmask 326912
        %v578 = vsel %vm577, %v576, %v571
        %v579 = vadd.s32 %v546, 4294967256
        %v580 = vlaneseq
        %v581 = vshrl.u32 %v580, 7
        %v582 = vsub.s32 %v579, %v581
        %v583 = vrot.slane %v518, %v582
        %vm584 = vcmask 392512
        %v585 = vsel %vm584, %v583, %v578
        %v586 = vadd.s32 %v546, 4294967248
        %v587 = vlaneseq
        %v588 = vshrl.u32 %v587, 7
        %v589 = vsub.s32 %v586, %v588
        %v590 = vrot.slane %v519, %v589
        %vm591 = vcmask 458112
        %v592 = vsel %vm591, %v590, %v585
        %v593 = vadd.s32 %v546, 4294967240
        %v594 = vlaneseq
        %v595 = vshrl.u32 %v594, 7
        %v596 = vsub.s32 %v593, %v595
        %v597 = vrot.slane %v520, %v596
        %vm598 = vcmask 523712
        %v599 = vsel %vm598, %v597, %v592
        %v600 = vadd.s32 %v546, 4294967232
        %v601 = vlaneseq
        %v602 = vshrl.u32 %v601, 7
        %v603 = vsub.s32 %v600, %v602
        %v604 = vrot.slane %v521, %v603
        %vm605 = vcmask 589312
        %v606 = vsel %vm605, %v604, %v599
        %v607 = vadd.s32 %v546, 4294967224
        %v608 = vlaneseq
        %v609 = vshrl.u32 %v608, 7
        %v610 = vsub.s32 %v607, %v609
        %v611 = vrot.slane %v522, %v610
        %vm612 = vcmask 654912
        %v613 = vsel %vm612, %v611, %v606
        %v614 = vadd.s32 %v546, 4294967216
        %v615 = vlaneseq
        %v616 = vshrl.u32 %v615, 7
        %v617 = vsub.s32 %v614, %v616
        %v618 = vrot.slane %v523, %v617
        %vm619 = vcmask 720512
        %v620 = vsel %vm619, %v618, %v613
        %v621 = vadd.s32 %v546, 4294967208
        %v622 = vlaneseq
        %v623 = vshrl.u32 %v622, 7
        %v624 = vsub.s32 %v621, %v623
        %v625 = vrot.slane %v524, %v624
        %vm626 = vcmask 786112
        %v627 = vsel %vm626, %v625, %v620
        %v628 = vadd.s32 %v546, 4294967200
        %v629 = vlaneseq
        %v630 = vshrl.u32 %v629, 7
        %v631 = vsub.s32 %v628, %v630
        %v632 = vrot.slane %v525, %v631
        %vm633 = vcmask 851712
        %v634 = vsel %vm633, %v632, %v627
        %v635 = vadd.s32 %v546, 4294967192
        %v636 = vlaneseq
        %v637 = vshrl.u32 %v636, 7
        %v638 = vsub.s32 %v635, %v637
        %v639 = vrot.slane %v526, %v638
        %vm640 = vcmask 917312
        %v641 = vsel %vm640, %v639, %v634
        %v642 = vadd.s32 %v546, 4294967184
        %v643 = vlaneseq
        %v644 = vshrl.u32 %v643, 7
        %v645 = vsub.s32 %v642, %v644
        %v646 = vrot.slane %v527, %v645
        %vm647 = vcmask 982912
        %v648 = vsel %vm647, %v646, %v641
        %v649 = vadd.s32 %v546, 4294967176
        %v650 = vlaneseq
        %v651 = vshrl.u32 %v650, 7
        %v652 = vsub.s32 %v649, %v651
        %v653 = vrot.slane %v528, %v652
        %vm654 = vcmask 1048512
        %v655 = vsel %vm654, %v653, %v648
        %657 = vst [vmem:[%s231] sm:$0x1] %v655
        %s658 = sand.u32 %s139, 1
        %s659 = scalar_lea.sflag [#allocation4], %s658
        %s660 = sand.u32 %s139, 1
        %s661 = scalar_lea.vmem [#allocation3], %s660
        // Predicated region
        $region41: #{tpu_custom_call.1} parent=39 // pred_check
          %p662 = pneg %p149
        $region42: #{tpu_custom_call.1} parent=39 // pred_check_branch
          %664 = sbr.rel (%p662) target = $region44
        $region43: #{tpu_custom_call.1} parent=39 // pred_region
          %s666 = ssub.s32 16, 16
          %667 = vsyncadd %s659, %s666
          %s668 = smul.addr %s21, 16
          %s669 = scalar_lea.hbm %s5, %s668
          %s671 = sshll.u32 %s661, 4
          %s672 = int_to_ptr.vmem [resolvable:$true] %s671
          %674 = dma.vmem_to_hbm [thread:$0]  %s672, 16, %s669, %s659
        $region44: #{tpu_custom_call.1} parent=39 // pred_fallthru
          _
      $region40: #{tpu_custom_call.1} parent=5 // pred_fallthru
        _
      %p675 = scmp.le.s32.totalorder 2, %s16
      // Predicated region
      $region45: #{tpu_custom_call.1} parent=5 // pred_check
        %p676 = pneg %p675
      $region46: #{tpu_custom_call.1} parent=5 // pred_check_branch
        %678 = sbr.rel (%p676) target = $region48
      $region47: #{tpu_custom_call.1} parent=5 // pred_region
        %s679 = ssub.s32 %s16, 2
        // Predicated region
        $region49: #{tpu_custom_call.1} parent=47 // pred_check
          %p680 = pneg %p155
        $region50: #{tpu_custom_call.1} parent=47 // pred_check_branch
          %682 = sbr.rel (%p680) target = $region52
        $region51: #{tpu_custom_call.1} parent=47 // pred_region
          %s683 = sand.u32 %s140, 1
          %s684 = scalar_lea.sflag [#allocation4], %s683
          %s685 = sand.u32 %s140, 1
          %s686 = scalar_lea.vmem [#allocation3], %s685
          %687 = dma.done %s684, 16
        $region52: #{tpu_custom_call.1} parent=47 // pred_fallthru
          _
      $region48: #{tpu_custom_call.1} parent=5 // pred_fallthru
        _
    $region6: #{tpu_custom_call.1} parent=1 // loop_footer
      %s20 = sadd.s32 1, %s16
    $region7: #{tpu_custom_call.1} parent=1 // loop_footer_branch
      %15 = sbr.rel target = $region3
    $region8: #{tpu_custom_call.1} parent=1 // loop_exit
      _
    %688 = vsyncpa [#allocation4], 1
    %s689 = scalar_lea.sflag [#allocation4], 1
    %690 = vsyncpa %s689, 1

</llo_original>
